<compile_context>
chip_gen: v7x
topology: tpu7x:2x2x1
jax: 0.10.0
libtpu: 0.0.40
codegen_flags: <defaults>
</compile_context>

<pallas_src>
import jax
import jax.numpy as jnp
from jax.experimental import pallas as pl
from jax.experimental.pallas import tpu as pltpu


GROUP = 32                       # batch rows packed per 128-lane row (32 * 4 = 128 lanes)
D_IN, D_H1, D_H2, D_OUT = 4, 10, 6, 3


def mlp_kernel(x_ref, w1_ref, b1_ref, w2_ref, b2_ref, w3_ref, b3_ref, o_ref):
    # x_ref: (rt, 128) packed lane-dense input, lane = 4*b_local + feature.
    # wN_ref: block-diagonal kron(I_32, Wn.T) -> the de-interleave is fused into
    #         the matmuls; every op is independent per packed row / batch column.
    x = x_ref[...]
    h1 = jnp.dot(x, w1_ref[...], preferred_element_type=jnp.float32) + b1_ref[...]
    h1 = jnp.maximum(h1, 0.0)
    h2 = jnp.dot(h1, w2_ref[...], preferred_element_type=jnp.float32) + b2_ref[...]
    h2 = jnp.maximum(h2, 0.0)
    y = jnp.dot(h2, w3_ref[...], preferred_element_type=jnp.float32) + b3_ref[...]
    o_ref[...] = y.astype(o_ref.dtype)


def _round_up(a, m):
    return ((a + m - 1) // m) * m


def mlp_forward(x, params, max_batch_tile=32768):
    """x: (B, 4) float32.  params: PyTorch-layout (W:(out,in), b:(out,)) x3."""
    w1, b1, w2, b2, w3, b3 = params
    B = x.shape[0]

    # ---- Lane-dense packing.  Row-major reshape is free; a pad copy only
    #      happens for B % 32 != 0 or tiny batches (< 256 rows).
    B_pack = max(_round_up(B, GROUP), 8 * GROUP)          # >= 8 packed rows
    if B_pack != B:
        x = jnp.pad(x, ((0, B_pack - B), (0, 0)))
    rows = B_pack // GROUP
    xp = x.reshape(rows, GROUP * D_IN)                    # (rows, 128)

    # ---- Block-diagonal weights: fuse feature de-interleave into the MXU.
    eye = jnp.eye(GROUP, dtype=x.dtype)
    w1b = jnp.kron(eye, w1.T)                             # (128, 320)
    w2b = jnp.kron(eye, w2.T)                             # (320, 192)
    w3b = jnp.kron(eye, w3.T)                             # (192,  96)
    b1b = jnp.tile(b1, GROUP).reshape(1, -1)              # (1, 320)
    b2b = jnp.tile(b2, GROUP).reshape(1, -1)              # (1, 192)
    b3b = jnp.tile(b3, GROUP).reshape(1, -1)              # (1,  96)

    # ---- Grid first, tile second: balanced tiles, grid >= 2 keeps both v7x
    #      TensorCores fed; tile is a multiple of 8 packed rows (sublane align).
    max_rows = max(8, max_batch_tile // GROUP)
    n_prog = pl.cdiv(rows, max_rows)
    if rows >= 16:
        n_prog = max(n_prog, 2)
    rt = _round_up(pl.cdiv(rows, n_prog), 8)
    if rt > rows:                                         # never exceed array extent
        rt = (rows // 8) * 8
    grid = (pl.cdiv(rows, rt),)

    def resident(a):
        # Full array, same block every grid step -> stays resident in VMEM.
        return pl.BlockSpec(a.shape, lambda i: (0, 0))

    cost = pl.CostEstimate(
        flops=2 * rows * (128 * 320 + 320 * 192 + 192 * 96),
        transcendentals=0,
        bytes_accessed=4 * (rows * GROUP * (D_IN + D_OUT)
                            + w1b.size + w2b.size + w3b.size
                            + b1b.size + b2b.size + b3b.size),
    )

    out_packed = pl.pallas_call(
        mlp_kernel,
        out_shape=jax.ShapeDtypeStruct((rows, GROUP * D_OUT), x.dtype),
        grid=grid,
        in_specs=[
            pl.BlockSpec((rt, GROUP * D_IN), lambda i: (i, 0)),   # x tile over batch rows
            resident(w1b), resident(b1b),
            resident(w2b), resident(b2b),
            resident(w3b), resident(b3b),
        ],
        out_specs=pl.BlockSpec((rt, GROUP * D_OUT), lambda i: (i, 0)),
        compiler_params=pltpu.CompilerParams(
            dimension_semantics=("parallel",),            # v7x: 2 TCs split the batch grid
            vmem_limit_bytes=32 * 1024 * 1024,
        ),
        cost_estimate=cost,
    )(xp, w1b, b1b, w2b, b2b, w3b, b3b)

    out = out_packed.reshape(rows * GROUP, D_OUT)         # free reshape back to (B_pack, 3)
    return out[:B] if B_pack != B else out


def init_params(key):
    # PyTorch default Linear init: U(-1/sqrt(fan_in), 1/sqrt(fan_in)),
    # weights stored (out_features, in_features) like nn.Linear.
    dims = [(D_IN, D_H1), (D_H1, D_H2), (D_H2, D_OUT)]
    params = []
    for fan_in, fan_out in dims:
        key, kw, kb = jax.random.split(key, 3)
        bound = 1.0 / (fan_in ** 0.5)
        w = jax.random.uniform(kw, (fan_out, fan_in), jnp.float32, -bound, bound)
        b = jax.random.uniform(kb, (fan_out,), jnp.float32, -bound, bound)
        params += [w, b]
    return params


def mlp_reference(x, params):
    w1, b1, w2, b2, w3, b3 = params
    h1 = jnp.maximum(x @ w1.T + b1, 0.0)
    h2 = jnp.maximum(h1 @ w2.T + b2, 0.0)
    return h2 @ w3.T + b3


if __name__ == "__main__":
    key = jax.random.PRNGKey(0)
    key, kx1, kx2 = jax.random.split(key, 3)
    params = init_params(key)

    # Small, module-consistent shapes: batch=8, in_features=4 (single grid step).
    x_small = jax.random.normal(kx1, (8, 4), jnp.float32)
    out_small = jax.block_until_ready(mlp_forward(x_small, params))
    ref_small = mlp_reference(x_small, params)
    assert out_small.shape == (8, 3), out_small.shape
    assert jnp.allclose(out_small, ref_small, atol=1e-5, rtol=1e-5), "mismatch (B=8)"

    # Exercise grid > 1, boundary (non-divisible) tiles and batch padding/slicing.
    x_big = jax.random.normal(kx2, (300, 4), jnp.float32)
    out_big = jax.block_until_ready(mlp_forward(x_big, params, max_batch_tile=256))
    ref_big = mlp_reference(x_big, params)
    assert out_big.shape == (300, 3), out_big.shape
    assert jnp.allclose(out_big, ref_big, atol=1e-5, rtol=1e-5), "mismatch (B=300)"

    print("KERNEL_OK")
</pallas_src>

<mosaic_0001>
module attributes {stable_mosaic.version = 11 : i64} {
  func.func @mlp_kernel(%arg0: i32, %arg1: memref<8x128xf32, #tpu.memory_space<vmem>>, %arg2: memref<128x320xf32, #tpu.memory_space<vmem>>, %arg3: memref<1x320xf32, #tpu.memory_space<vmem>>, %arg4: memref<320x192xf32, #tpu.memory_space<vmem>>, %arg5: memref<1x192xf32, #tpu.memory_space<vmem>>, %arg6: memref<192x96xf32, #tpu.memory_space<vmem>>, %arg7: memref<1x96xf32, #tpu.memory_space<vmem>>, %arg8: memref<8x96xf32, #tpu.memory_space<vmem>>) attributes {dimension_semantics = [#tpu.dimension_semantics<parallel>], iteration_bounds = array<i64: 1>, scalar_prefetch = 0 : i64, scratch_operands = 0 : i64, tpu.core_type = #tpu.core_type<tc>, window_params = [{transform_indices = @transform_0, window_bounds = array<i64: 8, 128>}, {pipeline_mode = #tpu.pipeline_mode<synchronous>, transform_indices = @transform_1, window_bounds = array<i64: 128, 320>}, {pipeline_mode = #tpu.pipeline_mode<synchronous>, transform_indices = @transform_2, window_bounds = array<i64: 1, 320>}, {pipeline_mode = #tpu.pipeline_mode<synchronous>, transform_indices = @transform_3, window_bounds = array<i64: 320, 192>}, {pipeline_mode = #tpu.pipeline_mode<synchronous>, transform_indices = @transform_4, window_bounds = array<i64: 1, 192>}, {pipeline_mode = #tpu.pipeline_mode<synchronous>, transform_indices = @transform_5, window_bounds = array<i64: 192, 96>}, {pipeline_mode = #tpu.pipeline_mode<synchronous>, transform_indices = @transform_6, window_bounds = array<i64: 1, 96>}, {transform_indices = @transform_7, window_bounds = array<i64: 8, 96>}]} {
    %c0 = arith.constant 0 : index
    %c0_0 = arith.constant 0 : index
    %0 = vector.load %arg1[%c0, %c0_0] : memref<8x128xf32, #tpu.memory_space<vmem>>, vector<8x128xf32>
    %c0_1 = arith.constant 0 : index
    %c0_2 = arith.constant 0 : index
    %1 = vector.load %arg2[%c0_1, %c0_2] : memref<128x320xf32, #tpu.memory_space<vmem>>, vector<128x320xf32>
    %cst = arith.constant dense<0.000000e+00> : vector<8x320xf32>
    %2 = tpu.matmul %0, %1, %cst {dimension_numbers = #tpu.dot_dimension_numbers<[1], [0], [0], [1], [0, 0, 1, 1], [], []>} : vector<8x128xf32>, vector<128x320xf32>, vector<8x320xf32> -> vector<8x320xf32>
    %c0_3 = arith.constant 0 : index
    %c0_4 = arith.constant 0 : index
    %3 = vector.load %arg3[%c0_3, %c0_4] : memref<1x320xf32, #tpu.memory_space<vmem>>, vector<1x320xf32>
    %4 = vector.broadcast %3 : vector<1x320xf32> to vector<8x320xf32>
    %5 = arith.addf %2, %4 : vector<8x320xf32>
    %cst_5 = arith.constant 0.000000e+00 : f32
    %6 = vector.broadcast %cst_5 : f32 to vector<8x320xf32>
    %7 = arith.maximumf %5, %6 : vector<8x320xf32>
    %c0_6 = arith.constant 0 : index
    %c0_7 = arith.constant 0 : index
    %8 = vector.load %arg4[%c0_6, %c0_7] : memref<320x192xf32, #tpu.memory_space<vmem>>, vector<320x192xf32>
    %cst_8 = arith.constant dense<0.000000e+00> : vector<8x192xf32>
    %9 = tpu.matmul %7, %8, %cst_8 {dimension_numbers = #tpu.dot_dimension_numbers<[1], [0], [0], [1], [0, 0, 1, 1], [], []>} : vector<8x320xf32>, vector<320x192xf32>, vector<8x192xf32> -> vector<8x192xf32>
    %c0_9 = arith.constant 0 : index
    %c0_10 = arith.constant 0 : index
    %10 = vector.load %arg5[%c0_9, %c0_10] : memref<1x192xf32, #tpu.memory_space<vmem>>, vector<1x192xf32>
    %11 = vector.broadcast %10 : vector<1x192xf32> to vector<8x192xf32>
    %12 = arith.addf %9, %11 : vector<8x192xf32>
    %cst_11 = arith.constant 0.000000e+00 : f32
    %13 = vector.broadcast %cst_11 : f32 to vector<8x192xf32>
    %14 = arith.maximumf %12, %13 : vector<8x192xf32>
    %c0_12 = arith.constant 0 : index
    %c0_13 = arith.constant 0 : index
    %15 = vector.load %arg6[%c0_12, %c0_13] : memref<192x96xf32, #tpu.memory_space<vmem>>, vector<192x96xf32>
    %cst_14 = arith.constant dense<0.000000e+00> : vector<8x96xf32>
    %16 = tpu.matmul %14, %15, %cst_14 {dimension_numbers = #tpu.dot_dimension_numbers<[1], [0], [0], [1], [0, 0, 1, 1], [], []>} : vector<8x192xf32>, vector<192x96xf32>, vector<8x96xf32> -> vector<8x96xf32>
    %c0_15 = arith.constant 0 : index
    %c0_16 = arith.constant 0 : index
    %17 = vector.load %arg7[%c0_15, %c0_16] : memref<1x96xf32, #tpu.memory_space<vmem>>, vector<1x96xf32>
    %18 = vector.broadcast %17 : vector<1x96xf32> to vector<8x96xf32>
    %19 = arith.addf %16, %18 : vector<8x96xf32>
    %c0_17 = arith.constant 0 : index
    %c0_18 = arith.constant 0 : index
    %20 = vector.load %arg8[%c0_17, %c0_18] : memref<8x96xf32, #tpu.memory_space<vmem>>, vector<8x96xf32>
    tpu.vector_store %arg8[%c0_17, %c0_18], %19 {strides = array<i32>} : memref<8x96xf32, #tpu.memory_space<vmem>>, vector<8x96xf32>,
    return
  }
  func.func @transform_0(%arg0: i32) -> (i32, i32) {
    %c0_i32 = arith.constant 0 : i32
    %c0_i32_0 = arith.constant 0 : i32
    return %arg0, %c0_i32 : i32, i32
  }
  func.func @transform_1(%arg0: i32) -> (i32, i32) {
    %c0_i32 = arith.constant 0 : i32
    %c0_i32_0 = arith.constant 0 : i32
    %c0_i32_1 = arith.constant 0 : i32
    return %c0_i32, %c0_i32_0 : i32, i32
  }
  func.func @transform_2(%arg0: i32) -> (i32, i32) {
    %c0_i32 = arith.constant 0 : i32
    %c0_i32_0 = arith.constant 0 : i32
    %c0_i32_1 = arith.constant 0 : i32
    return %c0_i32, %c0_i32_0 : i32, i32
  }
  func.func @transform_3(%arg0: i32) -> (i32, i32) {
    %c0_i32 = arith.constant 0 : i32
    %c0_i32_0 = arith.constant 0 : i32
    %c0_i32_1 = arith.constant 0 : i32
    return %c0_i32, %c0_i32_0 : i32, i32
  }
  func.func @transform_4(%arg0: i32) -> (i32, i32) {
    %c0_i32 = arith.constant 0 : i32
    %c0_i32_0 = arith.constant 0 : i32
    %c0_i32_1 = arith.constant 0 : i32
    return %c0_i32, %c0_i32_0 : i32, i32
  }
  func.func @transform_5(%arg0: i32) -> (i32, i32) {
    %c0_i32 = arith.constant 0 : i32
    %c0_i32_0 = arith.constant 0 : i32
    %c0_i32_1 = arith.constant 0 : i32
    return %c0_i32, %c0_i32_0 : i32, i32
  }
  func.func @transform_6(%arg0: i32) -> (i32, i32) {
    %c0_i32 = arith.constant 0 : i32
    %c0_i32_0 = arith.constant 0 : i32
    %c0_i32_1 = arith.constant 0 : i32
    return %c0_i32, %c0_i32_0 : i32, i32
  }
  func.func @transform_7(%arg0: i32) -> (i32, i32) {
    %c0_i32 = arith.constant 0 : i32
    %c0_i32_0 = arith.constant 0 : i32
    return %arg0, %c0_i32 : i32, i32
  }
}

</mosaic_0001>

<llo_original>
// kernel: tpu_custom_call.1
$region0: #{tpu_custom_call.1}
  #allocation0 [shape = 'u32[]', space=smem, size = 0x4, offset = 0x4, fixed_abs, tag = 'smem constant byte address 0x4 - core index']
  #allocation1 [shape = 'u32[144,128]{1,0:T(1,128)}', space=vmem, size = 0x12000, scoped, tag = 'internal scratch']
  %s0 = inlined_call_operand.vmem [shape: f32[8,128], index: 0, kind: input, shape index: {}]
  %s1 = inlined_call_operand.vmem [shape: f32[128,320], index: 1, kind: input, shape index: {}]
  %s2 = inlined_call_operand.vmem [shape: f32[1,320], index: 2, kind: input, shape index: {}]
  %s3 = inlined_call_operand.vmem [shape: f32[320,192], index: 3, kind: input, shape index: {}]
  %s4 = inlined_call_operand.vmem [shape: f32[1,192], index: 4, kind: input, shape index: {}]
  %s5 = inlined_call_operand.vmem [shape: f32[192,96], index: 5, kind: input, shape index: {}]
  %s6 = inlined_call_operand.vmem [shape: f32[1,96], index: 6, kind: input, shape index: {}]
  %s7 = inlined_call_operand.hbm [shape: f32[8,96], index: 7, kind: output, shape index: {}]
  %s8 = sld [smem:[#allocation0]]
  $region38: #{tpu_custom_call.1} parent=0
    _
  %s10 = ssub.s32 1, %s8
  %s11 = scalar_select 0, %s10, %s8
  $region1: #{tpu_custom_call.1} parent=0
    #allocation2 [shape = 'u8[4096]{0}', space=vmem, size = 0x1000, scoped, tag = 'output window, operand 0, single buffered']
    #allocation3 [shape = 's32[1]{0}', space=sflag, size = 0x4, scoped, tag = 'scoped memory for tpu_custom_call.1']
    %12 = vsyncpa [#allocation3], 0
    // Predicated region
    $region2: #{tpu_custom_call.1} parent=1 // pred_check
      _
    $region3: #{tpu_custom_call.1} parent=1 // pred_check_branch
      %14 = sbr.rel (0) target = $region5
    $region4: #{tpu_custom_call.1} parent=1 // pred_region
      _
    $region5: #{tpu_custom_call.1} parent=1 // pred_fallthru
      _
    // Predicated region
    $region6: #{tpu_custom_call.1} parent=1 // pred_check
      _
    $region7: #{tpu_custom_call.1} parent=1 // pred_check_branch
      %16 = sbr.rel (0) target = $region9
    $region8: #{tpu_custom_call.1} parent=1 // pred_region
      _
    $region9: #{tpu_custom_call.1} parent=1 // pred_fallthru
      _
    // Predicated region
    $region10: #{tpu_custom_call.1} parent=1 // pred_check
      _
    $region11: #{tpu_custom_call.1} parent=1 // pred_check_branch
      %18 = sbr.rel (0) target = $region13
    $region12: #{tpu_custom_call.1} parent=1 // pred_region
      _
    $region13: #{tpu_custom_call.1} parent=1 // pred_fallthru
      _
    // Predicated region
    $region14: #{tpu_custom_call.1} parent=1 // pred_check
      _
    $region15: #{tpu_custom_call.1} parent=1 // pred_check_branch
      %20 = sbr.rel (0) target = $region17
    $region16: #{tpu_custom_call.1} parent=1 // pred_region
      _
    $region17: #{tpu_custom_call.1} parent=1 // pred_fallthru
      _
    // Predicated region
    $region18: #{tpu_custom_call.1} parent=1 // pred_check
      _
    $region19: #{tpu_custom_call.1} parent=1 // pred_check_branch
      %22 = sbr.rel (0) target = $region21
    $region20: #{tpu_custom_call.1} parent=1 // pred_region
      _
    $region21: #{tpu_custom_call.1} parent=1 // pred_fallthru
      _
    // Predicated region
    $region22: #{tpu_custom_call.1} parent=1 // pred_check
      _
    $region23: #{tpu_custom_call.1} parent=1 // pred_check_branch
      %24 = sbr.rel (0) target = $region25
    $region24: #{tpu_custom_call.1} parent=1 // pred_region
      _
    $region25: #{tpu_custom_call.1} parent=1 // pred_fallthru
      _
    // Predicated region
    $region26: #{tpu_custom_call.1} parent=1 // pred_check
      _
    $region27: #{tpu_custom_call.1} parent=1 // pred_check_branch
      %26 = sbr.rel (0) target = $region29
    $region28: #{tpu_custom_call.1} parent=1 // pred_region
      _
    $region29: #{tpu_custom_call.1} parent=1 // pred_fallthru
      _
    %v27 = vld [vmem:[%s0] sm:$0xff]
    %v28 = vld [vmem:[%s1] sm:$0xff]
    %v29 = vld [vmem:[%s1 + $0x8] sm:$0xff]
    %v30 = vld [vmem:[%s1 + $0x10] sm:$0xff]
    %v31 = vld [vmem:[%s1 + $0x18] sm:$0xff]
    %v32 = vld [vmem:[%s1 + $0x20] sm:$0xff]
    %v33 = vld [vmem:[%s1 + $0x28] sm:$0xff]
    %v34 = vld [vmem:[%s1 + $0x30] sm:$0xff]
    %v35 = vld [vmem:[%s1 + $0x38] sm:$0xff]
    %v36 = vld [vmem:[%s1 + $0x40] sm:$0xff]
    %v37 = vld [vmem:[%s1 + $0x48] sm:$0xff]
    %v38 = vld [vmem:[%s1 + $0x50] sm:$0xff]
    %v39 = vld [vmem:[%s1 + $0x58] sm:$0xff]
    %v40 = vld [vmem:[%s1 + $0x60] sm:$0xff]
    %v41 = vld [vmem:[%s1 + $0x68] sm:$0xff]
    %v42 = vld [vmem:[%s1 + $0x70] sm:$0xff]
    %v43 = vld [vmem:[%s1 + $0x78] sm:$0xff]
    %v44 = vld [vmem:[%s1 + $0x80] sm:$0xff]
    %v45 = vld [vmem:[%s1 + $0x88] sm:$0xff]
    %v46 = vld [vmem:[%s1 + $0x90] sm:$0xff]
    %v47 = vld [vmem:[%s1 + $0x98] sm:$0xff]
    %v48 = vld [vmem:[%s1 + $0xa0] sm:$0xff]
    %v49 = vld [vmem:[%s1 + $0xa8] sm:$0xff]
    %v50 = vld [vmem:[%s1 + $0xb0] sm:$0xff]
    %v51 = vld [vmem:[%s1 + $0xb8] sm:$0xff]
    %v52 = vld [vmem:[%s1 + $0xc0] sm:$0xff]
    %v53 = vld [vmem:[%s1 + $0xc8] sm:$0xff]
    %v54 = vld [vmem:[%s1 + $0xd0] sm:$0xff]
    %v55 = vld [vmem:[%s1 + $0xd8] sm:$0xff]
    %v56 = vld [vmem:[%s1 + $0xe0] sm:$0xff]
    %v57 = vld [vmem:[%s1 + $0xe8] sm:$0xff]
    %v58 = vld [vmem:[%s1 + $0xf0] sm:$0xff]
    %v59 = vld [vmem:[%s1 + $0xf8] sm:$0xff]
    %v60 = vld [vmem:[%s1 + $0x100] sm:$0xff]
    %v61 = vld [vmem:[%s1 + $0x108] sm:$0xff]
    %v62 = vld [vmem:[%s1 + $0x110] sm:$0xff]
    %v63 = vld [vmem:[%s1 + $0x118] sm:$0xff]
    %v64 = vld [vmem:[%s1 + $0x120] sm:$0xff]
    %v65 = vld [vmem:[%s1 + $0x128] sm:$0xff]
    %v66 = vld [vmem:[%s1 + $0x130] sm:$0xff]
    %v67 = vld [vmem:[%s1 + $0x138] sm:$0xff]
    %v68 = vld [vmem:[%s1 + $0x140] sm:$0xff]
    %v69 = vld [vmem:[%s1 + $0x148] sm:$0xff]
    %v70 = vld [vmem:[%s1 + $0x150] sm:$0xff]
    %v71 = vld [vmem:[%s1 + $0x158] sm:$0xff]
    %v72 = vld [vmem:[%s1 + $0x160] sm:$0xff]
    %v73 = vld [vmem:[%s1 + $0x168] sm:$0xff]
    %v74 = vld [vmem:[%s1 + $0x170] sm:$0xff]
    %v75 = vld [vmem:[%s1 + $0x178] sm:$0xff]
    %v76 = vld [vmem:[%s2] sm:$0x7]
    %v78 = vlaneseq
    %v79 = vshrl.u32 %v78, 7
    %v80 = vsub.s32 0, %v79
    %v81 = vrot.slane %v76, %v80
    %v82 = vlaneseq
    %v83 = vshrl.u32 %v82, 7
    %v84 = vsub.s32 1, %v83
    %v85 = vrot.slane %v76, %v84
    %v86 = vlaneseq
    %v87 = vshrl.u32 %v86, 7
    %v88 = vsub.s32 2, %v87
    %v89 = vrot.slane %v76, %v88
    %93 = vmatprep.subr.mxu0 %v29
    %94 = vmatpush1.msra.mxu0 %v28
    %95 = vmatprep.subr.mxu0 %v32
    %96 = vmatpush1.msra.mxu0 %v31
    %97 = vmatprep.subr.mxu0 %v35
    %98 = vmatpush1.msra.mxu0 %v34
    %99 = vmatprep.subr.mxu0 %v38
    %100 = vmatpush1.msra.mxu0 %v37
    %101 = vmatprep.subr.mxu0 %v41
    %102 = vmatpush1.msra.mxu0 %v40
    %103 = vmatprep.subr.mxu0 %v44
    %104 = vmatpush1.msra.mxu0 %v43
    %105 = vmatprep.subr.mxu0 %v47
    %106 = vmatpush1.msra.mxu0 %v46
    %107 = vmatprep.subr.mxu0 %v50
    %108 = vmatpush1.msra.mxu0 %v49
    %109 = vmatprep.subr.mxu0 %v53
    %110 = vmatpush1.msra.mxu0 %v52
    %111 = vmatprep.subr.mxu0 %v56
    %112 = vmatpush1.msra.mxu0 %v55
    %113 = vmatprep.subr.mxu0 %v59
    %114 = vmatpush1.msra.mxu0 %v58
    %115 = vmatprep.subr.mxu0 %v62
    %116 = vmatpush1.msra.mxu0 %v61
    %117 = vmatprep.subr.mxu0 %v65
    %118 = vmatpush1.msra.mxu0 %v64
    %119 = vmatprep.subr.mxu0 %v68
    %120 = vmatpush1.msra.mxu0 %v67
    %121 = vmatprep.subr.mxu0 %v71
    %122 = vmatpush1.msra.mxu0 %v70
    %123 = vmatprep.subr.mxu0 %v74
    %124 = vmatpush1.msra.mxu0 %v73
    %125 = vmatprep.subr.mxu0 0.0
    %126 = vmatpush1.msra.mxu0 0.0
    %127 = vmatprep.subr.mxu0 0.0
    %128 = vmatpush1.msra.mxu0 0.0
    %129 = vmatprep.subr.mxu0 0.0
    %130 = vmatpush1.msra.mxu0 0.0
    %131 = vmatprep.subr.mxu0 0.0
    %132 = vmatpush1.msra.mxu0 0.0
    %133 = vmatprep.subr.mxu0 0.0
    %134 = vmatpush1.msra.mxu0 0.0
    %135 = vmatprep.subr.mxu0 0.0
    %136 = vmatpush1.msra.mxu0 0.0
    %137 = vmatprep.subr.mxu0 0.0
    %138 = vmatpush1.msra.mxu0 0.0
    %139 = vmatprep.subr.mxu0 0.0
    %140 = vmatpush1.msra.mxu0 0.0
    %141 = vmatprep.subr.mxu0 0.0
    %142 = vmatpush1.msra.mxu0 0.0
    %143 = vmatprep.subr.mxu0 0.0
    %144 = vmatpush1.msra.mxu0 0.0
    %145 = vmatprep.subr.mxu0 0.0
    %146 = vmatpush1.msra.mxu0 0.0
    %147 = vmatprep.subr.mxu0 0.0
    %148 = vmatpush1.msra.mxu0 0.0
    %149 = vmatprep.subr.mxu0 0.0
    %150 = vmatpush1.msra.mxu0 0.0
    %151 = vmatprep.subr.mxu0 0.0
    %152 = vmatpush1.msra.mxu0 0.0
    %153 = vmatprep.subr.mxu0 0.0
    %154 = vmatpush1.msra.mxu0 0.0
    %155 = vmatprep.subr.mxu0 0.0
    %156 = vmatpush1.msra.mxu0 0.0
    %157 = vmatprep.mubr.f32.mxu0 0.0
    %158 = vmatmul.mubr.f32.gmra.mrb[0].mxu0 %v27
    %v159 = vpop.f32.mrb[0].mxu0
    %v160 = vadd.f32 %v81, %v159
    %v161 = vpop.f32.mrb[0].mxu0
    %v162 = vadd.f32 %v85, %v161
    %163 = vdwg.mxu0
    %164 = vmatprep.subr.mxu0 0.0
    %165 = vmatpush1.msra.mxu0 %v30
    %166 = vmatprep.subr.mxu0 0.0
    %167 = vmatpush1.msra.mxu0 %v33
    %168 = vmatprep.subr.mxu0 0.0
    %169 = vmatpush1.msra.mxu0 %v36
    %170 = vmatprep.subr.mxu0 0.0
    %171 = vmatpush1.msra.mxu0 %v39
    %172 = vmatprep.subr.mxu0 0.0
    %173 = vmatpush1.msra.mxu0 %v42
    %174 = vmatprep.subr.mxu0 0.0
    %175 = vmatpush1.msra.mxu0 %v45
    %176 = vmatprep.subr.mxu0 0.0
    %177 = vmatpush1.msra.mxu0 %v48
    %178 = vmatprep.subr.mxu0 0.0
    %179 = vmatpush1.msra.mxu0 %v51
    %180 = vmatprep.subr.mxu0 0.0
    %181 = vmatpush1.msra.mxu0 %v54
    %182 = vmatprep.subr.mxu0 0.0
    %183 = vmatpush1.msra.mxu0 %v57
    %184 = vmatprep.subr.mxu0 0.0
    %185 = vmatpush1.msra.mxu0 %v60
    %186 = vmatprep.subr.mxu0 0.0
    %187 = vmatpush1.msra.mxu0 %v63
    %188 = vmatprep.subr.mxu0 0.0
    %189 = vmatpush1.msra.mxu0 %v66
    %190 = vmatprep.subr.mxu0 0.0
    %191 = vmatpush1.msra.mxu0 %v69
    %192 = vmatprep.subr.mxu0 0.0
    %193 = vmatpush1.msra.mxu0 %v72
    %194 = vmatprep.subr.mxu0 0.0
    %195 = vmatpush1.msra.mxu0 %v75
    %196 = vmatprep.subr.mxu0 0.0
    %197 = vmatpush1.msra.mxu0 0.0
    %198 = vmatprep.subr.mxu0 0.0
    %199 = vmatpush1.msra.mxu0 0.0
    %200 = vmatprep.subr.mxu0 0.0
    %201 = vmatpush1.msra.mxu0 0.0
    %202 = vmatprep.subr.mxu0 0.0
    %203 = vmatpush1.msra.mxu0 0.0
    %204 = vmatprep.subr.mxu0 0.0
    %205 = vmatpush1.msra.mxu0 0.0
    %206 = vmatprep.subr.mxu0 0.0
    %207 = vmatpush1.msra.mxu0 0.0
    %208 = vmatprep.subr.mxu0 0.0
    %209 = vmatpush1.msra.mxu0 0.0
    %210 = vmatprep.subr.mxu0 0.0
    %211 = vmatpush1.msra.mxu0 0.0
    %212 = vmatprep.subr.mxu0 0.0
    %213 = vmatpush1.msra.mxu0 0.0
    %214 = vmatprep.subr.mxu0 0.0
    %215 = vmatpush1.msra.mxu0 0.0
    %216 = vmatprep.subr.mxu0 0.0
    %217 = vmatpush1.msra.mxu0 0.0
    %218 = vmatprep.subr.mxu0 0.0
    %219 = vmatpush1.msra.mxu0 0.0
    %220 = vmatprep.subr.mxu0 0.0
    %221 = vmatpush1.msra.mxu0 0.0
    %222 = vmatprep.subr.mxu0 0.0
    %223 = vmatpush1.msra.mxu0 0.0
    %224 = vmatprep.subr.mxu0 0.0
    %225 = vmatpush1.msra.mxu0 0.0
    %226 = vmatprep.subr.mxu0 0.0
    %227 = vmatpush1.msra.mxu0 0.0
    %228 = vmatprep.mubr.f32.mxu0 0.0
    %229 = vmatmul.mubr.f32.gmra.mrb[0].mxu0 %v27
    %v230 = vpop.f32.mrb[0].mxu0
    %v231 = vadd.f32 %v89, %v230
    %v232 = vpop.f32.mrb[0].mxu0
    %233 = vdwg.mxu0
    %v234 = vmax.f32 %v160, 0.0
    %v235 = vmax.f32 %v162, 0.0
    %v236 = vmax.f32 %v231, 0.0
    %v237 = vld [vmem:[%s3] sm:$0xff]
    %v238 = vld [vmem:[%s3 + $0x8] sm:$0xff]
    %v239 = vld [vmem:[%s3 + $0x10] sm:$0xff]
    %v240 = vld [vmem:[%s3 + $0x18] sm:$0xff]
    %v241 = vld [vmem:[%s3 + $0x20] sm:$0xff]
    %v242 = vld [vmem:[%s3 + $0x28] sm:$0xff]
    %v243 = vld [vmem:[%s3 + $0x30] sm:$0xff]
    %v244 = vld [vmem:[%s3 + $0x38] sm:$0xff]
    %v245 = vld [vmem:[%s3 + $0x40] sm:$0xff]
    %v246 = vld [vmem:[%s3 + $0x48] sm:$0xff]
    %v247 = vld [vmem:[%s3 + $0x50] sm:$0xff]
    %v248 = vld [vmem:[%s3 + $0x58] sm:$0xff]
    %v249 = vld [vmem:[%s3 + $0x60] sm:$0xff]
    %v250 = vld [vmem:[%s3 + $0x68] sm:$0xff]
    %v251 = vld [vmem:[%s3 + $0x70] sm:$0xff]
    %v252 = vld [vmem:[%s3 + $0x78] sm:$0xff]
    %v253 = vld [vmem:[%s3 + $0x80] sm:$0xff]
    %v254 = vld [vmem:[%s3 + $0x88] sm:$0xff]
    %v255 = vld [vmem:[%s3 + $0x90] sm:$0xff]
    %v256 = vld [vmem:[%s3 + $0x98] sm:$0xff]
    %v257 = vld [vmem:[%s3 + $0xa0] sm:$0xff]
    %v258 = vld [vmem:[%s3 + $0xa8] sm:$0xff]
    %v259 = vld [vmem:[%s3 + $0xb0] sm:$0xff]
    %v260 = vld [vmem:[%s3 + $0xb8] sm:$0xff]
    %v261 = vld [vmem:[%s3 + $0xc0] sm:$0xff]
    %v262 = vld [vmem:[%s3 + $0xc8] sm:$0xff]
    %v263 = vld [vmem:[%s3 + $0xd0] sm:$0xff]
    %v264 = vld [vmem:[%s3 + $0xd8] sm:$0xff]
    %v265 = vld [vmem:[%s3 + $0xe0] sm:$0xff]
    %v266 = vld [vmem:[%s3 + $0xe8] sm:$0xff]
    %v267 = vld [vmem:[%s3 + $0xf0] sm:$0xff]
    %v268 = vld [vmem:[%s3 + $0xf8] sm:$0xff]
    %v269 = vld [vmem:[%s3 + $0x100] sm:$0xff]
    %v270 = vld [vmem:[%s3 + $0x108] sm:$0xff]
    %v271 = vld [vmem:[%s3 + $0x110] sm:$0xff]
    %v272 = vld [vmem:[%s3 + $0x118] sm:$0xff]
    %v273 = vld [vmem:[%s3 + $0x120] sm:$0xff]
    %v274 = vld [vmem:[%s3 + $0x128] sm:$0xff]
    %v275 = vld [vmem:[%s3 + $0x130] sm:$0xff]
    %v276 = vld [vmem:[%s3 + $0x138] sm:$0xff]
    %v277 = vld [vmem:[%s3 + $0x140] sm:$0xff]
    %v278 = vld [vmem:[%s3 + $0x148] sm:$0xff]
    %v279 = vld [vmem:[%s3 + $0x150] sm:$0xff]
    %v280 = vld [vmem:[%s3 + $0x158] sm:$0xff]
    %v281 = vld [vmem:[%s3 + $0x160] sm:$0xff]
    %v282 = vld [vmem:[%s3 + $0x168] sm:$0xff]
    %v283 = vld [vmem:[%s3 + $0x170] sm:$0xff]
    %v284 = vld [vmem:[%s3 + $0x178] sm:$0xff]
    %v285 = vld [vmem:[%s3 + $0x180] sm:$0xff]
    %v286 = vld [vmem:[%s3 + $0x188] sm:$0xff]
    %v287 = vld [vmem:[%s3 + $0x190] sm:$0xff]
    %v288 = vld [vmem:[%s3 + $0x198] sm:$0xff]
    %v289 = vld [vmem:[%s3 + $0x1a0] sm:$0xff]
    %v290 = vld [vmem:[%s3 + $0x1a8] sm:$0xff]
    %v291 = vld [vmem:[%s3 + $0x1b0] sm:$0xff]
    %v292 = vld [vmem:[%s3 + $0x1b8] sm:$0xff]
    %v293 = vld [vmem:[%s3 + $0x1c0] sm:$0xff]
    %v294 = vld [vmem:[%s3 + $0x1c8] sm:$0xff]
    %v295 = vld [vmem:[%s3 + $0x1d0] sm:$0xff]
    %v296 = vld [vmem:[%s3 + $0x1d8] sm:$0xff]
    %v297 = vld [vmem:[%s3 + $0x1e0] sm:$0xff]
    %v298 = vld [vmem:[%s3 + $0x1e8] sm:$0xff]
    %v299 = vld [vmem:[%s3 + $0x1f0] sm:$0xff]
    %v300 = vld [vmem:[%s3 + $0x1f8] sm:$0xff]
    %v301 = vld [vmem:[%s3 + $0x200] sm:$0xff]
    %v302 = vld [vmem:[%s3 + $0x208] sm:$0xff]
    %v303 = vld [vmem:[%s3 + $0x210] sm:$0xff]
    %v304 = vld [vmem:[%s3 + $0x218] sm:$0xff]
    %v305 = vld [vmem:[%s3 + $0x220] sm:$0xff]
    %v306 = vld [vmem:[%s3 + $0x228] sm:$0xff]
    %v307 = vld [vmem:[%s3 + $0x230] sm:$0xff]
    %v308 = vld [vmem:[%s3 + $0x238] sm:$0xff]
    %v309 = vld [vmem:[%s3 + $0x240] sm:$0xff]
    %v310 = vld [vmem:[%s3 + $0x248] sm:$0xff]
    %v311 = vld [vmem:[%s3 + $0x250] sm:$0xff]
    %v312 = vld [vmem:[%s3 + $0x258] sm:$0xff]
    %v313 = vld [vmem:[%s3 + $0x260] sm:$0xff]
    %v314 = vld [vmem:[%s3 + $0x268] sm:$0xff]
    %v315 = vld [vmem:[%s3 + $0x270] sm:$0xff]
    %v316 = vld [vmem:[%s3 + $0x278] sm:$0xff]
    %v317 = vld [vmem:[%s4] sm:$0x3]
    %v319 = vlaneseq
    %v320 = vshrl.u32 %v319, 7
    %v321 = vsub.s32 0, %v320
    %v322 = vrot.slane %v317, %v321
    %v323 = vlaneseq
    %v324 = vshrl.u32 %v323, 7
    %v325 = vsub.s32 1, %v324
    %v326 = vrot.slane %v317, %v325
    %vm329 = vcmask 523264
    %v331 = vsel %vm329, %v236, 0
    %333 = vmatprep.subr.mxu0 %v238
    %334 = vmatpush1.msra.mxu0 %v237
    %335 = vmatprep.subr.mxu0 %v240
    %336 = vmatpush1.msra.mxu0 %v239
    %337 = vmatprep.subr.mxu0 %v242
    %338 = vmatpush1.msra.mxu0 %v241
    %339 = vmatprep.subr.mxu0 %v244
    %340 = vmatpush1.msra.mxu0 %v243
    %341 = vmatprep.subr.mxu0 %v246
    %342 = vmatpush1.msra.mxu0 %v245
    %343 = vmatprep.subr.mxu0 %v248
    %344 = vmatpush1.msra.mxu0 %v247
    %345 = vmatprep.subr.mxu0 %v250
    %346 = vmatpush1.msra.mxu0 %v249
    %347 = vmatprep.subr.mxu0 %v252
    %348 = vmatpush1.msra.mxu0 %v251
    %349 = vmatprep.subr.mxu0 %v254
    %350 = vmatpush1.msra.mxu0 %v253
    %351 = vmatprep.subr.mxu0 %v256
    %352 = vmatpush1.msra.mxu0 %v255
    %353 = vmatprep.subr.mxu0 %v258
    %354 = vmatpush1.msra.mxu0 %v257
    %355 = vmatprep.subr.mxu0 %v260
    %356 = vmatpush1.msra.mxu0 %v259
    %357 = vmatprep.subr.mxu0 %v262
    %358 = vmatpush1.msra.mxu0 %v261
    %359 = vmatprep.subr.mxu0 %v264
    %360 = vmatpush1.msra.mxu0 %v263
    %361 = vmatprep.subr.mxu0 %v266
    %362 = vmatpush1.msra.mxu0 %v265
    %363 = vmatprep.subr.mxu0 %v268
    %364 = vmatpush1.msra.mxu0 %v267
    %365 = vmatprep.subr.mxu0 %v270
    %366 = vmatpush1.msra.mxu0 %v269
    %367 = vmatprep.subr.mxu0 %v272
    %368 = vmatpush1.msra.mxu0 %v271
    %369 = vmatprep.subr.mxu0 %v274
    %370 = vmatpush1.msra.mxu0 %v273
    %371 = vmatprep.subr.mxu0 %v276
    %372 = vmatpush1.msra.mxu0 %v275
    %373 = vmatprep.subr.mxu0 %v278
    %374 = vmatpush1.msra.mxu0 %v277
    %375 = vmatprep.subr.mxu0 %v280
    %376 = vmatpush1.msra.mxu0 %v279
    %377 = vmatprep.subr.mxu0 %v282
    %378 = vmatpush1.msra.mxu0 %v281
    %379 = vmatprep.subr.mxu0 %v284
    %380 = vmatpush1.msra.mxu0 %v283
    %381 = vmatprep.subr.mxu0 %v286
    %382 = vmatpush1.msra.mxu0 %v285
    %383 = vmatprep.subr.mxu0 %v288
    %384 = vmatpush1.msra.mxu0 %v287
    %385 = vmatprep.subr.mxu0 %v290
    %386 = vmatpush1.msra.mxu0 %v289
    %387 = vmatprep.subr.mxu0 %v292
    %388 = vmatpush1.msra.mxu0 %v291
    %389 = vmatprep.subr.mxu0 %v294
    %390 = vmatpush1.msra.mxu0 %v293
    %391 = vmatprep.subr.mxu0 %v296
    %392 = vmatpush1.msra.mxu0 %v295
    %393 = vmatprep.subr.mxu0 %v298
    %394 = vmatpush1.msra.mxu0 %v297
    %395 = vmatprep.subr.mxu0 %v300
    %396 = vmatpush1.msra.mxu0 %v299
    %397 = vmatprep.mubr.f32.mxu0 %v235
    %398 = vmatmul.mubr.f32.gmra.mrb[0].mxu0 %v234
    %v399 = vpop.f32.mrb[0].mxu0
    %v400 = vadd.f32 %v322, %v399
    %v401 = vpop.f32.mrb[0].mxu0
    %v402 = vadd.f32 %v326, %v401
    %403 = vdwg.mxu0
    %404 = vmatprep.subr.mxu0 %v302
    %405 = vmatpush1.msra.mxu0 %v301
    %406 = vmatprep.subr.mxu0 %v304
    %407 = vmatpush1.msra.mxu0 %v303
    %408 = vmatprep.subr.mxu0 %v306
    %409 = vmatpush1.msra.mxu0 %v305
    %410 = vmatprep.subr.mxu0 %v308
    %411 = vmatpush1.msra.mxu0 %v307
    %412 = vmatprep.subr.mxu0 %v310
    %413 = vmatpush1.msra.mxu0 %v309
    %414 = vmatprep.subr.mxu0 %v312
    %415 = vmatpush1.msra.mxu0 %v311
    %416 = vmatprep.subr.mxu0 %v314
    %417 = vmatpush1.msra.mxu0 %v313
    %418 = vmatprep.subr.mxu0 %v316
    %419 = vmatpush1.msra.mxu0 %v315
    %420 = vmatprep.subr.mxu0 0.0
    %421 = vmatpush1.msra.mxu0 0.0
    %422 = vmatprep.subr.mxu0 0.0
    %423 = vmatpush1.msra.mxu0 0.0
    %424 = vmatprep.subr.mxu0 0.0
    %425 = vmatpush1.msra.mxu0 0.0
    %426 = vmatprep.subr.mxu0 0.0
    %427 = vmatpush1.msra.mxu0 0.0
    %428 = vmatprep.subr.mxu0 0.0
    %429 = vmatpush1.msra.mxu0 0.0
    %430 = vmatprep.subr.mxu0 0.0
    %431 = vmatpush1.msra.mxu0 0.0
    %432 = vmatprep.subr.mxu0 0.0
    %433 = vmatpush1.msra.mxu0 0.0
    %434 = vmatprep.subr.mxu0 0.0
    %435 = vmatpush1.msra.mxu0 0.0
    %436 = vmatprep.subr.mxu0 0.0
    %437 = vmatpush1.msra.mxu0 0.0
    %438 = vmatprep.subr.mxu0 0.0
    %439 = vmatpush1.msra.mxu0 0.0
    %440 = vmatprep.subr.mxu0 0.0
    %441 = vmatpush1.msra.mxu0 0.0
    %442 = vmatprep.subr.mxu0 0.0
    %443 = vmatpush1.msra.mxu0 0.0
    %444 = vmatprep.subr.mxu0 0.0
    %445 = vmatpush1.msra.mxu0 0.0
    %446 = vmatprep.subr.mxu0 0.0
    %447 = vmatpush1.msra.mxu0 0.0
    %448 = vmatprep.subr.mxu0 0.0
    %449 = vmatpush1.msra.mxu0 0.0
    %450 = vmatprep.subr.mxu0 0.0
    %451 = vmatpush1.msra.mxu0 0.0
    %452 = vmatprep.subr.mxu0 0.0
    %453 = vmatpush1.msra.mxu0 0.0
    %454 = vmatprep.subr.mxu0 0.0
    %455 = vmatpush1.msra.mxu0 0.0
    %456 = vmatprep.subr.mxu0 0.0
    %457 = vmatpush1.msra.mxu0 0.0
    %458 = vmatprep.subr.mxu0 0.0
    %459 = vmatpush1.msra.mxu0 0.0
    %460 = vmatprep.subr.mxu0 0.0
    %461 = vmatpush1.msra.mxu0 0.0
    %462 = vmatprep.subr.mxu0 0.0
    %463 = vmatpush1.msra.mxu0 0.0
    %464 = vmatprep.subr.mxu0 0.0
    %465 = vmatpush1.msra.mxu0 0.0
    %466 = vmatprep.subr.mxu0 0.0
    %467 = vmatpush1.msra.mxu0 0.0
    %468 = vmatprep.mubr.f32.mxu0 0.0
    %469 = vmatmul.mubr.f32.gmra.mrb[0].mxu0 %v331
    %v470 = vpop.f32.mrb[0].mxu0
    %v471 = vadd.f32 %v400, %v470
    %v472 = vpop.f32.mrb[0].mxu0
    %v473 = vadd.f32 %v402, %v472
    %474 = vdwg.mxu0
    %v475 = vmax.f32 %v471, 0.0
    %v476 = vmax.f32 %v473, 0.0
    %v477 = vld [vmem:[%s5] sm:$0xff]
    %v478 = vld [vmem:[%s5 + $0x8] sm:$0xff]
    %v479 = vld [vmem:[%s5 + $0x10] sm:$0xff]
    %v480 = vld [vmem:[%s5 + $0x18] sm:$0xff]
    %v481 = vld [vmem:[%s5 + $0x20] sm:$0xff]
    %v482 = vld [vmem:[%s5 + $0x28] sm:$0xff]
    %v483 = vld [vmem:[%s5 + $0x30] sm:$0xff]
    %v484 = vld [vmem:[%s5 + $0x38] sm:$0xff]
    %v485 = vld [vmem:[%s5 + $0x40] sm:$0xff]
    %v486 = vld [vmem:[%s5 + $0x48] sm:$0xff]
    %v487 = vld [vmem:[%s5 + $0x50] sm:$0xff]
    %v488 = vld [vmem:[%s5 + $0x58] sm:$0xff]
    %v489 = vld [vmem:[%s5 + $0x60] sm:$0xff]
    %v490 = vld [vmem:[%s5 + $0x68] sm:$0xff]
    %v491 = vld [vmem:[%s5 + $0x70] sm:$0xff]
    %v492 = vld [vmem:[%s5 + $0x78] sm:$0xff]
    %v493 = vld [vmem:[%s5 + $0x80] sm:$0xff]
    %v494 = vld [vmem:[%s5 + $0x88] sm:$0xff]
    %v495 = vld [vmem:[%s5 + $0x90] sm:$0xff]
    %v496 = vld [vmem:[%s5 + $0x98] sm:$0xff]
    %v497 = vld [vmem:[%s5 + $0xa0] sm:$0xff]
    %v498 = vld [vmem:[%s5 + $0xa8] sm:$0xff]
    %v499 = vld [vmem:[%s5 + $0xb0] sm:$0xff]
    %v500 = vld [vmem:[%s5 + $0xb8] sm:$0xff]
    %v501 = vld [vmem:[%s6] sm:$0x1]
    %v503 = vlaneseq
    %v504 = vshrl.u32 %v503, 7
    %v505 = vsub.s32 0, %v504
    %v506 = vrot.slane %v501, %v505
    %v509 = vsel %vm329, %v476, 0
    %511 = vmatprep.subr.mxu0 0.0
    %512 = vmatpush1.msra.mxu0 %v477
    %513 = vmatprep.subr.mxu0 0.0
    %514 = vmatpush1.msra.mxu0 %v478
    %515 = vmatprep.subr.mxu0 0.0
    %516 = vmatpush1.msra.mxu0 %v479
    %517 = vmatprep.subr.mxu0 0.0
    %518 = vmatpush1.msra.mxu0 %v480
    %519 = vmatprep.subr.mxu0 0.0
    %520 = vmatpush1.msra.mxu0 %v481
    %521 = vmatprep.subr.mxu0 0.0
    %522 = vmatpush1.msra.mxu0 %v482
    %523 = vmatprep.subr.mxu0 0.0
    %524 = vmatpush1.msra.mxu0 %v483
    %525 = vmatprep.subr.mxu0 0.0
    %526 = vmatpush1.msra.mxu0 %v484
    %527 = vmatprep.subr.mxu0 0.0
    %528 = vmatpush1.msra.mxu0 %v485
    %529 = vmatprep.subr.mxu0 0.0
    %530 = vmatpush1.msra.mxu0 %v486
    %531 = vmatprep.subr.mxu0 0.0
    %532 = vmatpush1.msra.mxu0 %v487
    %533 = vmatprep.subr.mxu0 0.0
    %534 = vmatpush1.msra.mxu0 %v488
    %535 = vmatprep.subr.mxu0 0.0
    %536 = vmatpush1.msra.mxu0 %v489
    %537 = vmatprep.subr.mxu0 0.0
    %538 = vmatpush1.msra.mxu0 %v490
    %539 = vmatprep.subr.mxu0 0.0
    %540 = vmatpush1.msra.mxu0 %v491
    %541 = vmatprep.subr.mxu0 0.0
    %542 = vmatpush1.msra.mxu0 %v492
    %543 = vmatprep.subr.mxu0 0.0
    %544 = vmatpush1.msra.mxu0 %v493
    %545 = vmatprep.subr.mxu0 0.0
    %546 = vmatpush1.msra.mxu0 %v494
    %547 = vmatprep.subr.mxu0 0.0
    %548 = vmatpush1.msra.mxu0 %v495
    %549 = vmatprep.subr.mxu0 0.0
    %550 = vmatpush1.msra.mxu0 %v496
    %551 = vmatprep.subr.mxu0 0.0
    %552 = vmatpush1.msra.mxu0 %v497
    %553 = vmatprep.subr.mxu0 0.0
    %554 = vmatpush1.msra.mxu0 %v498
    %555 = vmatprep.subr.mxu0 0.0
    %556 = vmatpush1.msra.mxu0 %v499
    %557 = vmatprep.subr.mxu0 0.0
    %558 = vmatpush1.msra.mxu0 %v500
    %559 = vmatprep.subr.mxu0 0.0
    %560 = vmatpush1.msra.mxu0 0.0
    %561 = vmatprep.subr.mxu0 0.0
    %562 = vmatpush1.msra.mxu0 0.0
    %563 = vmatprep.subr.mxu0 0.0
    %564 = vmatpush1.msra.mxu0 0.0
    %565 = vmatprep.subr.mxu0 0.0
    %566 = vmatpush1.msra.mxu0 0.0
    %567 = vmatprep.subr.mxu0 0.0
    %568 = vmatpush1.msra.mxu0 0.0
    %569 = vmatprep.subr.mxu0 0.0
    %570 = vmatpush1.msra.mxu0 0.0
    %571 = vmatprep.subr.mxu0 0.0
    %572 = vmatpush1.msra.mxu0 0.0
    %573 = vmatprep.subr.mxu0 0.0
    %574 = vmatpush1.msra.mxu0 0.0
    %575 = vmatprep.mubr.f32.mxu0 %v509
    %576 = vmatmul.mubr.f32.gmra.mrb[0].mxu0 %v475
    %v577 = vpop.f32.mrb[0].mxu0
    %v578 = vadd.f32 %v506, %v577
    %v579 = vpop.f32.mrb[0].mxu0
    %580 = vdwg.mxu0
    %vm581 = vcmask 785408
    %582 = vst.msk [vmem:[#allocation2] sm:$0xff] %vm581, %v578
    // Predicated region
    $region30: #{tpu_custom_call.1} parent=1 // pred_check
      _
    $region31: #{tpu_custom_call.1} parent=1 // pred_check_branch
      %584 = sbr.rel (0) target = $region33
    $region32: #{tpu_custom_call.1} parent=1 // pred_region
      %s586 = ssub.s32 128, 128
      %587 = vsyncadd [#allocation3], %s586
      %s589 = sshll.u32 [#allocation2], 4
      %s590 = int_to_ptr.vmem [resolvable:$true] %s589
      %592 = dma.vmem_to_hbm [thread:$0]  %s590, 128, %s7, [#allocation3]
    $region33: #{tpu_custom_call.1} parent=1 // pred_fallthru
      _
    // Predicated region
    $region34: #{tpu_custom_call.1} parent=1 // pred_check
      _
    $region35: #{tpu_custom_call.1} parent=1 // pred_check_branch
      %594 = sbr.rel (0) target = $region37
    $region36: #{tpu_custom_call.1} parent=1 // pred_region
      %595 = dma.done [#allocation3], 128
    $region37: #{tpu_custom_call.1} parent=1 // pred_fallthru
      _
    %596 = vsyncpa [#allocation3], 1

</llo_original>
